<compile_context>
chip_gen: v5e
topology: v5e:2x2
jax: 0.10.0
libtpu: 0.0.40
codegen_flags: <defaults>
</compile_context>

<pallas_src>
import jax
import jax.numpy as jnp
from jax.experimental import pallas as pl
from jax.experimental.pallas import tpu as pltpu


def _round_up(x, m):
    return -(-x // m) * m


def _mlp_kernel(x_ref, w1_ref, b1_ref, w2_ref, b2_ref, w3_ref, b3_ref, o_ref):
    # Layer 1: relu(x @ W1 + b1). obs tile arrives f32 straight from HBM; the
    # f32->bf16 cast is cheap VPU work hidden under DMA/MXU.
    x = x_ref[...].astype(jnp.bfloat16)
    h1 = jnp.dot(x, w1_ref[...], preferred_element_type=jnp.float32)
    h1 = jnp.maximum(h1 + b1_ref[...], 0.0)          # f32 elementwise (v5e-safe)
    # Layer 2: relu(h1 @ W2 + b2)
    h2 = jnp.dot(h1.astype(jnp.bfloat16), w2_ref[...],
                 preferred_element_type=jnp.float32)
    h2 = jnp.maximum(h2 + b2_ref[...], 0.0)
    # Layer 3: h2 @ W3 + b3 (no activation); lane-dense 128-wide block, bf16 out
    out = jnp.dot(h2.astype(jnp.bfloat16), w3_ref[...],
                  preferred_element_type=jnp.float32)
    o_ref[...] = (out + b3_ref[...]).astype(o_ref.dtype)


def prepare_params(params):
    """One-time weight/bias prep (pad + bf16 cast) hoisted out of the per-call path.

    Weights are stored (in, out) — transpose of PyTorch's (out, in) — so the
    kernel computes x @ W + b. Assumes hidden width is a multiple of 128.
    """
    in_dim, hidden = params["w1"].shape
    out_dim = params["w3"].shape[1]
    assert hidden % 128 == 0, "kernel assumes the hidden width is a multiple of 128"
    out_pad = max(128, _round_up(out_dim, 128))

    w1 = params["w1"].astype(jnp.bfloat16)
    w2 = params["w2"].astype(jnp.bfloat16)
    w3 = jnp.pad(params["w3"], ((0, 0), (0, out_pad - out_dim))).astype(jnp.bfloat16)

    b1 = params["b1"].reshape(1, hidden).astype(jnp.float32)
    b2 = params["b2"].reshape(1, hidden).astype(jnp.float32)
    b3 = jnp.pad(params["b3"], (0, out_pad - out_dim)).reshape(1, out_pad)
    b3 = b3.astype(jnp.float32)

    return {"w1": w1, "b1": b1, "w2": w2, "b2": b2, "w3": w3, "b3": b3,
            "in_dim": in_dim, "hidden": hidden,
            "out_dim": out_dim, "out_pad": out_pad}


def feedforward_nn_128(obs, prepared, *, batch_tile=1024):
    """Fused forward pass of FeedForwardNN_128.

    obs: (batch, in_dim) or (in_dim,) float32
    prepared: output of prepare_params() (pre-padded bf16 weights, f32 biases).
    """
    obs = jnp.asarray(obs, dtype=jnp.float32)
    if obs.ndim == 1:
        obs = obs[None, :]  # matches obs.unsqueeze(0) in the PyTorch module

    B, in_dim = obs.shape
    assert in_dim == prepared["in_dim"]
    hidden = prepared["hidden"]
    out_dim = prepared["out_dim"]
    out_pad = prepared["out_pad"]

    # Tile choice: big tiles amortise the ~0.35 us per-grid-step overhead; for
    # small B clamp the tile so we don't pad a single tile out to 128+ rows;
    # for large B keep >= 2 grid steps so v7x's two TensorCores share the work.
    if B <= 256:
        TB = max(16, _round_up(B, 16))
    else:
        TB = min(batch_tile, _round_up(-(-B // 2), 16))
    B_pad = _round_up(B, TB)

    x = obs if B_pad == B else jnp.pad(obs, ((0, B_pad - B), (0, 0)))
    grid = (B_pad // TB,)

    def resident(shape):
        # Constant index map -> block stays VMEM-resident across grid steps;
        # single buffer (no point double-buffering a constant operand).
        return pl.BlockSpec(shape, lambda i: tuple(0 for _ in shape),
                            pipeline_mode=pl.Buffered(1))

    # Actual VMEM footprint (double-buffered streamed operands + weights) with
    # 2x headroom; keep inside v7x's 32 MiB scoped limit (64 MiB physical).
    footprint = (2 * TB * in_dim * 4                      # obs tiles, f32
                 + 2 * TB * out_pad * 2                   # out tiles, bf16
                 + (in_dim * hidden + hidden * hidden + hidden * out_pad) * 2
                 + (2 * hidden + out_pad) * 4)            # biases, f32
    vmem_limit = int(min(32 << 20, max(4 << 20, 2 * footprint)))

    out_padded = pl.pallas_call(
        _mlp_kernel,
        out_shape=jax.ShapeDtypeStruct((B_pad, out_pad), jnp.bfloat16),
        grid=grid,
        in_specs=[
            pl.BlockSpec((TB, in_dim), lambda i: (i, 0)),   # obs tile (pipelined)
            resident((in_dim, hidden)),                     # W1 (VMEM-resident)
            resident((1, hidden)),                          # b1
            resident((hidden, hidden)),                     # W2
            resident((1, hidden)),                          # b2
            resident((hidden, out_pad)),                    # W3
            resident((1, out_pad)),                         # b3
        ],
        out_specs=pl.BlockSpec((TB, out_pad), lambda i: (i, 0)),
        compiler_params=pltpu.CompilerParams(
            dimension_semantics=("parallel",),
            vmem_limit_bytes=vmem_limit,
        ),
    )(x, prepared["w1"], prepared["b1"], prepared["w2"], prepared["b2"],
      prepared["w3"], prepared["b3"])

    # Slice + final f32 cast in the consumer (kernel emits bf16 to halve HBM
    # output write traffic).
    return out_padded[:B, :out_dim].astype(jnp.float32)


def init_params(key, in_dim, out_dim, hidden=128):
    """Deterministic init mimicking nn.Linear's U(-1/sqrt(fan_in), 1/sqrt(fan_in)).

    Weights stored as (in, out) so the kernel computes x @ W + b.
    """
    ks = jax.random.split(key, 6)

    def linear(kw, kb, fan_in, fan_out):
        bound = 1.0 / jnp.sqrt(jnp.float32(fan_in))
        w = jax.random.uniform(kw, (fan_in, fan_out), jnp.float32, -bound, bound)
        b = jax.random.uniform(kb, (fan_out,), jnp.float32, -bound, bound)
        return w, b

    w1, b1 = linear(ks[0], ks[1], in_dim, hidden)
    w2, b2 = linear(ks[2], ks[3], hidden, hidden)
    w3, b3 = linear(ks[4], ks[5], hidden, out_dim)
    return {"w1": w1, "b1": b1, "w2": w2, "b2": b2, "w3": w3, "b3": b3}


def _reference(obs, p):
    # Pure-f32 reference of the PyTorch module's forward pass.
    if obs.ndim == 1:
        obs = obs[None, :]
    h1 = jnp.maximum(obs @ p["w1"] + p["b1"], 0.0)
    h2 = jnp.maximum(h1 @ p["w2"] + p["b2"], 0.0)
    return h2 @ p["w3"] + p["b3"]


if __name__ == "__main__":
    key = jax.random.PRNGKey(0)
    k_param, k_obs = jax.random.split(key)

    batch, in_dim, out_dim = 2, 32, 16
    params = init_params(k_param, in_dim, out_dim)
    prepared = prepare_params(params)          # one-time weight prep (hoisted)
    obs = jax.random.normal(k_obs, (batch, in_dim), dtype=jnp.float32)

    out = feedforward_nn_128(obs, prepared)
    out = jax.block_until_ready(out)

    ref = _reference(obs, params)
    assert out.shape == (batch, out_dim)
    # bf16 MXU operands + bf16 output store (f32 accumulation) -> loosened
    # tolerance vs the f32 reference.
    assert jnp.allclose(out, ref, atol=5e-2, rtol=5e-2)

    # TODO(synk): the `odometer` counter is Python-side stateful bookkeeping, not compute.
    print("KERNEL_OK")
</pallas_src>

<mosaic_0001>
module attributes {stable_mosaic.version = 11 : i64} {
  func.func @_mlp_kernel(%arg0: i32, %arg1: memref<16x32xf32, #tpu.memory_space<vmem>>, %arg2: memref<32x128xbf16, #tpu.memory_space<vmem>>, %arg3: memref<1x128xf32, #tpu.memory_space<vmem>>, %arg4: memref<128x128xbf16, #tpu.memory_space<vmem>>, %arg5: memref<1x128xf32, #tpu.memory_space<vmem>>, %arg6: memref<128x128xbf16, #tpu.memory_space<vmem>>, %arg7: memref<1x128xf32, #tpu.memory_space<vmem>>, %arg8: memref<16x128xbf16, #tpu.memory_space<vmem>>) attributes {dimension_semantics = [#tpu.dimension_semantics<parallel>], iteration_bounds = array<i64: 1>, scalar_prefetch = 0 : i64, scratch_operands = 0 : i64, tpu.core_type = #tpu.core_type<tc>, window_params = [{transform_indices = @transform_0, window_bounds = array<i64: 16, 32>}, {pipeline_mode = #tpu.pipeline_mode<synchronous>, transform_indices = @transform_1, window_bounds = array<i64: 32, 128>}, {pipeline_mode = #tpu.pipeline_mode<synchronous>, transform_indices = @transform_2, window_bounds = array<i64: 1, 128>}, {pipeline_mode = #tpu.pipeline_mode<synchronous>, transform_indices = @transform_3, window_bounds = array<i64: 128, 128>}, {pipeline_mode = #tpu.pipeline_mode<synchronous>, transform_indices = @transform_4, window_bounds = array<i64: 1, 128>}, {pipeline_mode = #tpu.pipeline_mode<synchronous>, transform_indices = @transform_5, window_bounds = array<i64: 128, 128>}, {pipeline_mode = #tpu.pipeline_mode<synchronous>, transform_indices = @transform_6, window_bounds = array<i64: 1, 128>}, {transform_indices = @transform_7, window_bounds = array<i64: 16, 128>}]} {
    %c0 = arith.constant 0 : index
    %c0_0 = arith.constant 0 : index
    %0 = vector.load %arg1[%c0, %c0_0] : memref<16x32xf32, #tpu.memory_space<vmem>>, vector<16x32xf32>
    %1 = arith.truncf %0 : vector<16x32xf32> to vector<16x32xbf16>
    %c0_1 = arith.constant 0 : index
    %c0_2 = arith.constant 0 : index
    %2 = vector.load %arg2[%c0_1, %c0_2] : memref<32x128xbf16, #tpu.memory_space<vmem>>, vector<32x128xbf16>
    %cst = arith.constant dense<0.000000e+00> : vector<16x128xf32>
    %3 = tpu.matmul %1, %2, %cst {dimension_numbers = #tpu.dot_dimension_numbers<[1], [0], [0], [1], [0, 0, 1, 1], [], []>} : vector<16x32xbf16>, vector<32x128xbf16>, vector<16x128xf32> -> vector<16x128xf32>
    %c0_3 = arith.constant 0 : index
    %c0_4 = arith.constant 0 : index
    %4 = vector.load %arg3[%c0_3, %c0_4] : memref<1x128xf32, #tpu.memory_space<vmem>>, vector<1x128xf32>
    %5 = vector.broadcast %4 : vector<1x128xf32> to vector<16x128xf32>
    %6 = arith.addf %3, %5 : vector<16x128xf32>
    %cst_5 = arith.constant 0.000000e+00 : f32
    %7 = vector.broadcast %cst_5 : f32 to vector<16x128xf32>
    %8 = arith.maximumf %6, %7 : vector<16x128xf32>
    %9 = arith.truncf %8 : vector<16x128xf32> to vector<16x128xbf16>
    %c0_6 = arith.constant 0 : index
    %c0_7 = arith.constant 0 : index
    %10 = vector.load %arg4[%c0_6, %c0_7] : memref<128x128xbf16, #tpu.memory_space<vmem>>, vector<128x128xbf16>
    %cst_8 = arith.constant dense<0.000000e+00> : vector<16x128xf32>
    %11 = tpu.matmul %9, %10, %cst_8 {dimension_numbers = #tpu.dot_dimension_numbers<[1], [0], [0], [1], [0, 0, 1, 1], [], []>} : vector<16x128xbf16>, vector<128x128xbf16>, vector<16x128xf32> -> vector<16x128xf32>
    %c0_9 = arith.constant 0 : index
    %c0_10 = arith.constant 0 : index
    %12 = vector.load %arg5[%c0_9, %c0_10] : memref<1x128xf32, #tpu.memory_space<vmem>>, vector<1x128xf32>
    %13 = vector.broadcast %12 : vector<1x128xf32> to vector<16x128xf32>
    %14 = arith.addf %11, %13 : vector<16x128xf32>
    %cst_11 = arith.constant 0.000000e+00 : f32
    %15 = vector.broadcast %cst_11 : f32 to vector<16x128xf32>
    %16 = arith.maximumf %14, %15 : vector<16x128xf32>
    %17 = arith.truncf %16 : vector<16x128xf32> to vector<16x128xbf16>
    %c0_12 = arith.constant 0 : index
    %c0_13 = arith.constant 0 : index
    %18 = vector.load %arg6[%c0_12, %c0_13] : memref<128x128xbf16, #tpu.memory_space<vmem>>, vector<128x128xbf16>
    %cst_14 = arith.constant dense<0.000000e+00> : vector<16x128xf32>
    %19 = tpu.matmul %17, %18, %cst_14 {dimension_numbers = #tpu.dot_dimension_numbers<[1], [0], [0], [1], [0, 0, 1, 1], [], []>} : vector<16x128xbf16>, vector<128x128xbf16>, vector<16x128xf32> -> vector<16x128xf32>
    %c0_15 = arith.constant 0 : index
    %c0_16 = arith.constant 0 : index
    %20 = vector.load %arg7[%c0_15, %c0_16] : memref<1x128xf32, #tpu.memory_space<vmem>>, vector<1x128xf32>
    %21 = vector.broadcast %20 : vector<1x128xf32> to vector<16x128xf32>
    %22 = arith.addf %19, %21 : vector<16x128xf32>
    %23 = arith.truncf %22 : vector<16x128xf32> to vector<16x128xbf16>
    %c0_17 = arith.constant 0 : index
    %c0_18 = arith.constant 0 : index
    %24 = vector.load %arg8[%c0_17, %c0_18] : memref<16x128xbf16, #tpu.memory_space<vmem>>, vector<16x128xbf16>
    tpu.vector_store %arg8[%c0_17, %c0_18], %23 {strides = array<i32>} : memref<16x128xbf16, #tpu.memory_space<vmem>>, vector<16x128xbf16>,
    return
  }
  func.func @transform_0(%arg0: i32) -> (i32, i32) {
    %c0_i32 = arith.constant 0 : i32
    %c0_i32_0 = arith.constant 0 : i32
    return %arg0, %c0_i32 : i32, i32
  }
  func.func @transform_1(%arg0: i32) -> (i32, i32) {
    %c0_i32 = arith.constant 0 : i32
    %c0_i32_0 = arith.constant 0 : i32
    %c0_i32_1 = arith.constant 0 : i32
    return %c0_i32, %c0_i32_0 : i32, i32
  }
  func.func @transform_2(%arg0: i32) -> (i32, i32) {
    %c0_i32 = arith.constant 0 : i32
    %c0_i32_0 = arith.constant 0 : i32
    %c0_i32_1 = arith.constant 0 : i32
    return %c0_i32, %c0_i32_0 : i32, i32
  }
  func.func @transform_3(%arg0: i32) -> (i32, i32) {
    %c0_i32 = arith.constant 0 : i32
    %c0_i32_0 = arith.constant 0 : i32
    %c0_i32_1 = arith.constant 0 : i32
    return %c0_i32, %c0_i32_0 : i32, i32
  }
  func.func @transform_4(%arg0: i32) -> (i32, i32) {
    %c0_i32 = arith.constant 0 : i32
    %c0_i32_0 = arith.constant 0 : i32
    %c0_i32_1 = arith.constant 0 : i32
    return %c0_i32, %c0_i32_0 : i32, i32
  }
  func.func @transform_5(%arg0: i32) -> (i32, i32) {
    %c0_i32 = arith.constant 0 : i32
    %c0_i32_0 = arith.constant 0 : i32
    %c0_i32_1 = arith.constant 0 : i32
    return %c0_i32, %c0_i32_0 : i32, i32
  }
  func.func @transform_6(%arg0: i32) -> (i32, i32) {
    %c0_i32 = arith.constant 0 : i32
    %c0_i32_0 = arith.constant 0 : i32
    %c0_i32_1 = arith.constant 0 : i32
    return %c0_i32, %c0_i32_0 : i32, i32
  }
  func.func @transform_7(%arg0: i32) -> (i32, i32) {
    %c0_i32 = arith.constant 0 : i32
    %c0_i32_0 = arith.constant 0 : i32
    return %arg0, %c0_i32 : i32, i32
  }
}

</mosaic_0001>

<llo_original>
// kernel: tpu_custom_call.1
$region0: #{tpu_custom_call.1}
  #allocation0 [shape = 'u32[]', space=smem, size = 0x4, offset = 0x4, fixed_abs, tag = 'smem constant byte address 0x4 - core index']
  #allocation1 [shape = 'u32[72,128]{1,0:T(1,128)}', space=vmem, size = 0x9000, scoped, tag = 'internal scratch']
  %s0 = inlined_call_operand.hbm [shape: f32[16,32], index: 0, kind: input, shape index: {}]
  %s1 = inlined_call_operand.hbm [shape: bf16[32,128], index: 1, kind: input, shape index: {}]
  %s2 = inlined_call_operand.vmem [shape: f32[1,128], index: 2, kind: input, shape index: {}]
  %s3 = inlined_call_operand.hbm [shape: bf16[128,128], index: 3, kind: input, shape index: {}]
  %s4 = inlined_call_operand.vmem [shape: f32[1,128], index: 4, kind: input, shape index: {}]
  %s5 = inlined_call_operand.hbm [shape: bf16[128,128], index: 5, kind: input, shape index: {}]
  %s6 = inlined_call_operand.vmem [shape: f32[1,128], index: 6, kind: input, shape index: {}]
  %s7 = inlined_call_operand.hbm [shape: bf16[16,128], index: 7, kind: output, shape index: {}]
  %s8 = sld [smem:[#allocation0]]
  $region54: #{tpu_custom_call.1} parent=0
    _
  %s10 = ssub.s32 1, %s8
  %s11 = scalar_select 0, %s10, %s8
  $region1: #{tpu_custom_call.1} parent=0
    #allocation2 [shape = 'u8[8192]{0}', space=vmem, size = 0x2000, scoped, tag = 'input window, operand 0, single buffered']
    #allocation3 [shape = 's32[1]{0}', space=sflag, size = 0x4, scoped, tag = 'scoped memory for tpu_custom_call.1']
    #allocation4 [shape = 's32[1]{0}', space=sflag, size = 0x4, scoped, tag = 'scoped memory for tpu_custom_call.1']
    #allocation5 [shape = 'u8[8192]{0}', space=vmem, size = 0x2000, scoped, tag = 'input window, operand 1, single buffered']
    #allocation6 [shape = 's32[1]{0}', space=sflag, size = 0x4, scoped, tag = 'scoped memory for tpu_custom_call.1']
    #allocation7 [shape = 'u8[32768]{0}', space=vmem, size = 0x8000, scoped, tag = 'input window, operand 3, single buffered']
    #allocation8 [shape = 'u8[32768]{0}', space=vmem, size = 0x8000, scoped, tag = 'input window, operand 5, single buffered']
    #allocation9 [shape = 's32[1]{0}', space=sflag, size = 0x4, scoped, tag = 'scoped memory for tpu_custom_call.1']
    #allocation10 [shape = 'u8[4096]{0}', space=vmem, size = 0x1000, scoped, tag = 'output window, operand 0, single buffered']
    %12 = vsyncpa [#allocation3], 0
    %13 = vsyncpa [#allocation6], 0
    %14 = vsyncpa [#allocation9], 0
    %15 = vsyncpa [#allocation4], 0
    // Predicated region
    $region2: #{tpu_custom_call.1} parent=1 // pred_check
      _
    $region3: #{tpu_custom_call.1} parent=1 // pred_check_branch
      %17 = sbr.rel (0) target = $region5
    $region4: #{tpu_custom_call.1} parent=1 // pred_region
      %19 = vsyncadd [#allocation3], 0
      %s20 = sshll.u32 %s0, 4
      %s21 = int_to_ptr.hbm [resolvable:$true] %s20
      %s22 = sshll.u32 [#allocation2], 4
      %s23 = int_to_ptr.vmem [resolvable:$true] %s22
      %28 = dma.hbm_to_vmem [thread:$0]  %s21, 256, %s23, [#allocation3], 128, 128, 8
    $region5: #{tpu_custom_call.1} parent=1 // pred_fallthru
      _
    // Predicated region
    $region6: #{tpu_custom_call.1} parent=1 // pred_check
      _
    $region7: #{tpu_custom_call.1} parent=1 // pred_check_branch
      %30 = sbr.rel (0) target = $region9
    $region8: #{tpu_custom_call.1} parent=1 // pred_region
      %32 = vsyncadd [#allocation6], 0
      %s33 = sshll.u32 %s1, 4
      %s34 = int_to_ptr.hbm [resolvable:$true] %s33
      %s35 = sshll.u32 [#allocation5], 4
      %s36 = int_to_ptr.vmem [resolvable:$true] %s35
      %41 = dma.hbm_to_vmem [thread:$0]  %s34, 256, %s36, [#allocation6], 64, 64, 4
    $region9: #{tpu_custom_call.1} parent=1 // pred_fallthru
      _
    // Predicated region
    $region10: #{tpu_custom_call.1} parent=1 // pred_check
      _
    $region11: #{tpu_custom_call.1} parent=1 // pred_check_branch
      %43 = sbr.rel (0) target = $region13
    $region12: #{tpu_custom_call.1} parent=1 // pred_region
      _
    $region13: #{tpu_custom_call.1} parent=1 // pred_fallthru
      _
    // Predicated region
    $region14: #{tpu_custom_call.1} parent=1 // pred_check
      _
    $region15: #{tpu_custom_call.1} parent=1 // pred_check_branch
      %45 = sbr.rel (0) target = $region17
    $region16: #{tpu_custom_call.1} parent=1 // pred_region
      %47 = vsyncadd [#allocation6], 0
      %s48 = sshll.u32 %s3, 4
      %s49 = int_to_ptr.hbm [resolvable:$true] %s48
      %s50 = sshll.u32 [#allocation7], 4
      %s51 = int_to_ptr.vmem [resolvable:$true] %s50
      %56 = dma.hbm_to_vmem [thread:$0]  %s49, 1024, %s51, [#allocation6], 64, 64, 4
    $region17: #{tpu_custom_call.1} parent=1 // pred_fallthru
      _
    // Predicated region
    $region18: #{tpu_custom_call.1} parent=1 // pred_check
      _
    $region19: #{tpu_custom_call.1} parent=1 // pred_check_branch
      %58 = sbr.rel (0) target = $region21
    $region20: #{tpu_custom_call.1} parent=1 // pred_region
      _
    $region21: #{tpu_custom_call.1} parent=1 // pred_fallthru
      _
    // Predicated region
    $region22: #{tpu_custom_call.1} parent=1 // pred_check
      _
    $region23: #{tpu_custom_call.1} parent=1 // pred_check_branch
      %60 = sbr.rel (0) target = $region25
    $region24: #{tpu_custom_call.1} parent=1 // pred_region
      %62 = vsyncadd [#allocation9], 0
      %s63 = sshll.u32 %s5, 4
      %s64 = int_to_ptr.hbm [resolvable:$true] %s63
      %s65 = sshll.u32 [#allocation8], 4
      %s66 = int_to_ptr.vmem [resolvable:$true] %s65
      %71 = dma.hbm_to_vmem [thread:$0]  %s64, 1024, %s66, [#allocation9], 64, 64, 4
    $region25: #{tpu_custom_call.1} parent=1 // pred_fallthru
      _
    // Predicated region
    $region26: #{tpu_custom_call.1} parent=1 // pred_check
      _
    $region27: #{tpu_custom_call.1} parent=1 // pred_check_branch
      %73 = sbr.rel (0) target = $region29
    $region28: #{tpu_custom_call.1} parent=1 // pred_region
      _
    $region29: #{tpu_custom_call.1} parent=1 // pred_fallthru
      _
    // Predicated region
    $region30: #{tpu_custom_call.1} parent=1 // pred_check
      _
    $region31: #{tpu_custom_call.1} parent=1 // pred_check_branch
      %75 = sbr.rel (0) target = $region33
    $region32: #{tpu_custom_call.1} parent=1 // pred_region
      %77 = dma.done [#allocation3], 256
    $region33: #{tpu_custom_call.1} parent=1 // pred_fallthru
      _
    // Predicated region
    $region34: #{tpu_custom_call.1} parent=1 // pred_check
      _
    $region35: #{tpu_custom_call.1} parent=1 // pred_check_branch
      %79 = sbr.rel (0) target = $region37
    $region36: #{tpu_custom_call.1} parent=1 // pred_region
      %81 = dma.done [#allocation6], 256
    $region37: #{tpu_custom_call.1} parent=1 // pred_fallthru
      _
    // Predicated region
    $region38: #{tpu_custom_call.1} parent=1 // pred_check
      _
    $region39: #{tpu_custom_call.1} parent=1 // pred_check_branch
      %83 = sbr.rel (0) target = $region41
    $region40: #{tpu_custom_call.1} parent=1 // pred_region
      %85 = dma.done [#allocation6], 1024
    $region41: #{tpu_custom_call.1} parent=1 // pred_fallthru
      _
    // Predicated region
    $region42: #{tpu_custom_call.1} parent=1 // pred_check
      _
    $region43: #{tpu_custom_call.1} parent=1 // pred_check_branch
      %87 = sbr.rel (0) target = $region45
    $region44: #{tpu_custom_call.1} parent=1 // pred_region
      %89 = dma.done [#allocation9], 1024
    $region45: #{tpu_custom_call.1} parent=1 // pred_fallthru
      _
    %v91 = vld [vmem:[#allocation2] sm:$0xff]
    %v92 = vld [vmem:[#allocation2 + $0x8] sm:$0xff]
    %v93 = vpack.c.bf16 %v92, %v91
    %v94 = vld [vmem:[#allocation5] sm:$0xf]
    %v95 = vld [vmem:[#allocation5 + $0x4] sm:$0xf]
    %v96 = vld [vmem:[#allocation5 + $0x8] sm:$0xf]
    %v97 = vld [vmem:[#allocation5 + $0xc] sm:$0xf]
    %v98 = vld [vmem:[%s2] sm:$0x1]
    %v100 = vperm.slane %v98, 0
    %v106 = vunpack.c.l.b16 %v94
    %v107 = vunpack.c.l.b16 %v95
    %v108 = vunpack.c.l.b16 %v96
    %v109 = vunpack.c.l.b16 %v97
    %v110 = vpack.c.b16 %v107, %v106
    %v111 = vpack.c.b16 %v109, %v108
    %vm114 = vcmask 261120
    %v116 = vsel %vm114, %v93, 0
    %118 = vmatpush.bf16.msra.mxu0 0
    %119 = vmatpush.bf16.msra.mxu0 0
    %120 = vmatpush.bf16.msra.mxu0 0
    %121 = vmatpush.bf16.msra.mxu0 0
    %122 = vmatpush.bf16.msra.mxu0 0
    %123 = vmatpush.bf16.msra.mxu0 0
    %124 = vmatpush.bf16.msra.mxu0 %v111
    %125 = vmatpush.bf16.msra.mxu0 %v110
    %126 = vmatmul.bf16.gmra.mxu0 %v116
    %v127 = vpop.f32.mrf.mxu0
    %v128 = vadd.f32 %v100, %v127
    %v129 = vpop.f32.mrf.mxu0
    %v130 = vadd.f32 %v100, %v129
    %131 = vdwg.mxu0
    %v132 = vmax.f32 %v128, 0.0
    %v133 = vmax.f32 %v130, 0.0
    %v134 = vpack.c.bf16 %v133, %v132
    %v135 = vld [vmem:[#allocation7] sm:$0xf]
    %v136 = vld [vmem:[#allocation7 + $0x4] sm:$0xf]
    %v137 = vld [vmem:[#allocation7 + $0x8] sm:$0xf]
    %v138 = vld [vmem:[#allocation7 + $0xc] sm:$0xf]
    %v139 = vld [vmem:[#allocation7 + $0x10] sm:$0xf]
    %v140 = vld [vmem:[#allocation7 + $0x14] sm:$0xf]
    %v141 = vld [vmem:[#allocation7 + $0x18] sm:$0xf]
    %v142 = vld [vmem:[#allocation7 + $0x1c] sm:$0xf]
    %v143 = vld [vmem:[#allocation7 + $0x20] sm:$0xf]
    %v144 = vld [vmem:[#allocation7 + $0x24] sm:$0xf]
    %v145 = vld [vmem:[#allocation7 + $0x28] sm:$0xf]
    %v146 = vld [vmem:[#allocation7 + $0x2c] sm:$0xf]
    %v147 = vld [vmem:[#allocation7 + $0x30] sm:$0xf]
    %v148 = vld [vmem:[#allocation7 + $0x34] sm:$0xf]
    %v149 = vld [vmem:[#allocation7 + $0x38] sm:$0xf]
    %v150 = vld [vmem:[#allocation7 + $0x3c] sm:$0xf]
    %v151 = vld [vmem:[%s4] sm:$0x1]
    %v153 = vperm.slane %v151, 0
    %v171 = vunpack.c.l.b16 %v135
    %v172 = vunpack.c.l.b16 %v136
    %v173 = vunpack.c.l.b16 %v137
    %v174 = vunpack.c.l.b16 %v138
    %v175 = vunpack.c.l.b16 %v139
    %v176 = vunpack.c.l.b16 %v140
    %v177 = vunpack.c.l.b16 %v141
    %v178 = vunpack.c.l.b16 %v142
    %v179 = vunpack.c.l.b16 %v143
    %v180 = vunpack.c.l.b16 %v144
    %v181 = vunpack.c.l.b16 %v145
    %v182 = vunpack.c.l.b16 %v146
    %v183 = vunpack.c.l.b16 %v147
    %v184 = vunpack.c.l.b16 %v148
    %v185 = vunpack.c.l.b16 %v149
    %v186 = vunpack.c.l.b16 %v150
    %v187 = vpack.c.b16 %v172, %v171
    %v188 = vpack.c.b16 %v174, %v173
    %v189 = vpack.c.b16 %v176, %v175
    %v190 = vpack.c.b16 %v178, %v177
    %v191 = vpack.c.b16 %v180, %v179
    %v192 = vpack.c.b16 %v182, %v181
    %v193 = vpack.c.b16 %v184, %v183
    %v194 = vpack.c.b16 %v186, %v185
    %203 = vmatpush.bf16.msra.mxu0 %v194
    %204 = vmatpush.bf16.msra.mxu0 %v193
    %205 = vmatpush.bf16.msra.mxu0 %v192
    %206 = vmatpush.bf16.msra.mxu0 %v191
    %207 = vmatpush.bf16.msra.mxu0 %v190
    %208 = vmatpush.bf16.msra.mxu0 %v189
    %209 = vmatpush.bf16.msra.mxu0 %v188
    %210 = vmatpush.bf16.msra.mxu0 %v187
    %211 = vmatmul.bf16.gmra.mxu0 %v134
    %v212 = vpop.f32.mrf.mxu0
    %v213 = vadd.f32 %v153, %v212
    %v214 = vpop.f32.mrf.mxu0
    %v215 = vadd.f32 %v153, %v214
    %216 = vdwg.mxu0
    %v217 = vmax.f32 %v213, 0.0
    %v218 = vmax.f32 %v215, 0.0
    %v219 = vpack.c.bf16 %v218, %v217
    %v220 = vld [vmem:[#allocation8] sm:$0xf]
    %v221 = vld [vmem:[#allocation8 + $0x4] sm:$0xf]
    %v222 = vld [vmem:[#allocation8 + $0x8] sm:$0xf]
    %v223 = vld [vmem:[#allocation8 + $0xc] sm:$0xf]
    %v224 = vld [vmem:[#allocation8 + $0x10] sm:$0xf]
    %v225 = vld [vmem:[#allocation8 + $0x14] sm:$0xf]
    %v226 = vld [vmem:[#allocation8 + $0x18] sm:$0xf]
    %v227 = vld [vmem:[#allocation8 + $0x1c] sm:$0xf]
    %v228 = vld [vmem:[#allocation8 + $0x20] sm:$0xf]
    %v229 = vld [vmem:[#allocation8 + $0x24] sm:$0xf]
    %v230 = vld [vmem:[#allocation8 + $0x28] sm:$0xf]
    %v231 = vld [vmem:[#allocation8 + $0x2c] sm:$0xf]
    %v232 = vld [vmem:[#allocation8 + $0x30] sm:$0xf]
    %v233 = vld [vmem:[#allocation8 + $0x34] sm:$0xf]
    %v234 = vld [vmem:[#allocation8 + $0x38] sm:$0xf]
    %v235 = vld [vmem:[#allocation8 + $0x3c] sm:$0xf]
    %v236 = vld [vmem:[%s6] sm:$0x1]
    %v238 = vperm.slane %v236, 0
    %v256 = vunpack.c.l.b16 %v220
    %v257 = vunpack.c.l.b16 %v221
    %v258 = vunpack.c.l.b16 %v222
    %v259 = vunpack.c.l.b16 %v223
    %v260 = vunpack.c.l.b16 %v224
    %v261 = vunpack.c.l.b16 %v225
    %v262 = vunpack.c.l.b16 %v226
    %v263 = vunpack.c.l.b16 %v227
    %v264 = vunpack.c.l.b16 %v228
    %v265 = vunpack.c.l.b16 %v229
    %v266 = vunpack.c.l.b16 %v230
    %v267 = vunpack.c.l.b16 %v231
    %v268 = vunpack.c.l.b16 %v232
    %v269 = vunpack.c.l.b16 %v233
    %v270 = vunpack.c.l.b16 %v234
    %v271 = vunpack.c.l.b16 %v235
    %v272 = vpack.c.b16 %v257, %v256
    %v273 = vpack.c.b16 %v259, %v258
    %v274 = vpack.c.b16 %v261, %v260
    %v275 = vpack.c.b16 %v263, %v262
    %v276 = vpack.c.b16 %v265, %v264
    %v277 = vpack.c.b16 %v267, %v266
    %v278 = vpack.c.b16 %v269, %v268
    %v279 = vpack.c.b16 %v271, %v270
    %288 = vmatpush.bf16.msra.mxu0 %v279
    %289 = vmatpush.bf16.msra.mxu0 %v278
    %290 = vmatpush.bf16.msra.mxu0 %v277
    %291 = vmatpush.bf16.msra.mxu0 %v276
    %292 = vmatpush.bf16.msra.mxu0 %v275
    %293 = vmatpush.bf16.msra.mxu0 %v274
    %294 = vmatpush.bf16.msra.mxu0 %v273
    %295 = vmatpush.bf16.msra.mxu0 %v272
    %296 = vmatmul.bf16.gmra.mxu0 %v219
    %v297 = vpop.f32.mrf.mxu0
    %v298 = vadd.f32 %v238, %v297
    %v299 = vpop.f32.mrf.mxu0
    %v300 = vadd.f32 %v238, %v299
    %301 = vdwg.mxu0
    %v302 = vpack.c.bf16 %v298, %v298
    %v303 = vpack.c.bf16 %v300, %v300
    %304 = vst [vmem:[#allocation10] sm:$0xf] %v302
    %305 = vst [vmem:[#allocation10 + $0x4] sm:$0xf] %v303
    // Predicated region
    $region46: #{tpu_custom_call.1} parent=1 // pred_check
      _
    $region47: #{tpu_custom_call.1} parent=1 // pred_check_branch
      %307 = sbr.rel (0) target = $region49
    $region48: #{tpu_custom_call.1} parent=1 // pred_region
      %309 = vsyncadd [#allocation4], 0
      %s310 = sshll.u32 [#allocation10], 4
      %s311 = int_to_ptr.vmem [resolvable:$true] %s310
      %s312 = sshll.u32 %s7, 4
      %s313 = int_to_ptr.hbm [resolvable:$true] %s312
      %318 = dma.vmem_to_hbm [thread:$0]  %s311, 128, %s313, [#allocation4], 64, 64, 4
    $region49: #{tpu_custom_call.1} parent=1 // pred_fallthru
      _
    // Predicated region
    $region50: #{tpu_custom_call.1} parent=1 // pred_check
      _
    $region51: #{tpu_custom_call.1} parent=1 // pred_check_branch
      %320 = sbr.rel (0) target = $region53
    $region52: #{tpu_custom_call.1} parent=1 // pred_region
      %322 = dma.done [#allocation4], 128
    $region53: #{tpu_custom_call.1} parent=1 // pred_fallthru
      _
    %323 = vsyncpa [#allocation3], 1
    %324 = vsyncpa [#allocation6], 1
    %325 = vsyncpa [#allocation9], 1
    %326 = vsyncpa [#allocation4], 1

</llo_original>
